<compile_context>
chip_gen: v5e
topology: v5e:2x2
jax: 0.10.0
libtpu: 0.0.40
codegen_flags: <defaults>
</compile_context>

<pallas_src>
import jax
import jax.numpy as jnp
from jax.experimental import pallas as pl
from jax.experimental.pallas import tpu as pltpu

_IN, _H1, _H2, _OUT = 784, 256, 64, 10
_OUT_PAD = 128          # lane-dense padded output width (unmasked vst)
_NEG_INF = -1e30        # pad-lane bias -> exp() underflows to exactly 0 in f32


def mnist_mlp_kernel(x_ref, w1_ref, b1_ref, w2_ref, b2_ref, w3_ref, b3_ref, o_ref):
    # x is streamed as f32; cast to bf16 in VMEM (hidden under the tile DMA) for the MXU.
    x = x_ref[...].astype(jnp.bfloat16)                        # (TILE_B, 784)

    # Layer 1: Linear(784 -> 256) + ReLU  (bf16 MXU inputs, f32 accumulate)
    h1 = jnp.dot(x, w1_ref[...], preferred_element_type=jnp.float32) + b1_ref[...]
    h1 = jnp.maximum(h1, 0.0)                                  # f32 VPU (v5e has no bf16 VPU)

    # Layer 2: Linear(256 -> 64) + ReLU
    h2 = jnp.dot(h1.astype(jnp.bfloat16), w2_ref[...],
                 preferred_element_type=jnp.float32) + b2_ref[...]
    h2 = jnp.maximum(h2, 0.0)

    # Output layer: Linear(64 -> 10, padded to 128 lanes) + softmax over dim=1
    logits = jnp.dot(h2.astype(jnp.bfloat16), w3_ref[...],
                     preferred_element_type=jnp.float32) + b3_ref[...]   # (TILE_B, 128)
    m = jnp.max(logits, axis=1, keepdims=True)                 # max comes from the 10 real lanes
    e = jnp.exp(logits - m)                                    # padded lanes: exp(-1e30) == 0
    denom = jnp.sum(e, axis=1, keepdims=True)
    # Exact divide so rows sum to 1 (kernel is not EUP/VALU-bound; approx reciprocal not needed).
    o_ref[...] = (e / denom).astype(o_ref.dtype)


def _round_up(n, m):
    return ((n + m - 1) // m) * m


def _choose_tiling(batch, max_tile):
    """16-row-aligned batch tiles (bf16 output packs 16 sublanes/vreg), sized to the batch so
    the padded tail is small; >=2 tiles for larger batches so v7x megacore shards the axis."""
    b16 = _round_up(batch, 16)
    num_tiles = pl.cdiv(b16, max_tile)
    if num_tiles == 1 and b16 >= 512:
        num_tiles = 2                      # keep both v7x TensorCores busy; ~free on v5e/v6e
    tile_b = _round_up(pl.cdiv(b16, num_tiles), 16)
    return tile_b, tile_b * num_tiles


def mnist_forward(x, params, max_tile_b=1024):
    """x: (B, 784) float32 (cast to bf16 inside the kernel). params: dict with w1,b1,w2,b2,w3,b3.
    Weights are pre-transposed to (in_features, out_features), stored bf16; biases (1, out) f32.
    Returns (B, 10) bf16 softmax probabilities."""
    w1, b1 = params["w1"], params["b1"]
    w2, b2 = params["w2"], params["b2"]
    w3, b3 = params["w3"], params["b3"]
    B = x.shape[0]

    # Pad the last layer to 128 output lanes for an unmasked, lane-dense store.
    w3p = jnp.pad(w3, ((0, 0), (0, _OUT_PAD - _OUT)))                            # zeros
    b3p = jnp.pad(b3, ((0, 0), (0, _OUT_PAD - _OUT)), constant_values=_NEG_INF)  # -inf-ish

    tile_b, b_pad = _choose_tiling(B, max_tile_b)
    if b_pad != B:
        x = jnp.pad(x, ((0, b_pad - B), (0, 0)))   # zero rows -> finite softmax, sliced off below
    num_tiles = b_pad // tile_b

    resident = lambda arr: pl.BlockSpec(arr.shape, lambda i: (0, 0))  # stays in VMEM, no re-DMA

    out = pl.pallas_call(
        mnist_mlp_kernel,
        out_shape=jax.ShapeDtypeStruct((b_pad, _OUT_PAD), jnp.bfloat16),
        grid=(num_tiles,),
        in_specs=[
            pl.BlockSpec((tile_b, _IN), lambda i: (i, 0)),   # x: streamed f32 per batch tile
            resident(w1), resident(b1),
            resident(w2), resident(b2),
            resident(w3p), resident(b3p),
        ],
        out_specs=pl.BlockSpec((tile_b, _OUT_PAD), lambda i: (i, 0)),
        compiler_params=pltpu.CompilerParams(
            dimension_semantics=("parallel",),   # megacore shard on v7x
            vmem_limit_bytes=32 << 20,           # ~24 MiB peak at 1024-row tiles; safe on v7x
        ),
    )(x, w1, b1, w2, b2, w3p, b3p)

    # TODO(synk): a consumer that accepts the padded (b_pad, 128) bf16 block directly would save
    # this final slice (one extra HBM pass over the kernel output).
    return out[:B, :_OUT]


def init_params(key):
    """Deterministic init mimicking nn.Linear default (uniform +/- 1/sqrt(fan_in)).
    Weights stored pre-transposed as (in, out) in bf16; biases (1, out) in f32."""
    dims = [(_IN, _H1), (_H1, _H2), (_H2, _OUT)]
    params = {}
    for i, (fan_in, fan_out) in enumerate(dims, start=1):
        key, kw, kb = jax.random.split(key, 3)
        bound = 1.0 / jnp.sqrt(fan_in)
        params[f"w{i}"] = jax.random.uniform(
            kw, (fan_in, fan_out), jnp.float32, minval=-bound, maxval=bound
        ).astype(jnp.bfloat16)
        params[f"b{i}"] = jax.random.uniform(
            kb, (1, fan_out), jnp.float32, minval=-bound, maxval=bound)
    return params


def reference_forward(x, params):
    """Pure-JAX f32 reference of the PyTorch module for sanity checking."""
    h1 = jnp.maximum(x @ params["w1"].astype(jnp.float32) + params["b1"], 0.0)
    h2 = jnp.maximum(h1 @ params["w2"].astype(jnp.float32) + params["b2"], 0.0)
    logits = h2 @ params["w3"].astype(jnp.float32) + params["b3"]
    return jax.nn.softmax(logits, axis=1)


if __name__ == "__main__":
    key = jax.random.PRNGKey(0)
    kx, kp = jax.random.split(key)

    B = 8  # small batch for the smoke test; kernel tiles any batch size
    x = jax.random.normal(kx, (B, _IN), dtype=jnp.float32)
    params = init_params(kp)

    y = mnist_forward(x, params)
    jax.block_until_ready(y)

    assert y.shape == (B, _OUT)
    # softmax rows sum to ~1 (exact f32 divide in-kernel; slack only from bf16 output store)
    row_sums = jnp.sum(y.astype(jnp.float32), axis=1)
    assert jnp.allclose(row_sums, 1.0, atol=1e-2), row_sums
    # matches the f32 reference up to bf16 quantization of x / weights / output
    y_ref = reference_forward(x, params)
    assert jnp.max(jnp.abs(y.astype(jnp.float32) - y_ref)) < 0.06
    print("KERNEL_OK")
</pallas_src>

<mosaic_0001>
module attributes {stable_mosaic.version = 11 : i64} {
  func.func @mnist_mlp_kernel(%arg0: i32, %arg1: memref<16x784xf32, #tpu.memory_space<vmem>>, %arg2: memref<784x256xbf16, #tpu.memory_space<vmem>>, %arg3: memref<1x256xf32, #tpu.memory_space<vmem>>, %arg4: memref<256x64xbf16, #tpu.memory_space<vmem>>, %arg5: memref<1x64xf32, #tpu.memory_space<vmem>>, %arg6: memref<64x128xbf16, #tpu.memory_space<vmem>>, %arg7: memref<1x128xf32, #tpu.memory_space<vmem>>, %arg8: memref<16x128xbf16, #tpu.memory_space<vmem>>) attributes {dimension_semantics = [#tpu.dimension_semantics<parallel>], iteration_bounds = array<i64: 1>, scalar_prefetch = 0 : i64, scratch_operands = 0 : i64, tpu.core_type = #tpu.core_type<tc>, window_params = [{transform_indices = @transform_0, window_bounds = array<i64: 16, 784>}, {pipeline_mode = #tpu.pipeline_mode<synchronous>, transform_indices = @transform_1, window_bounds = array<i64: 784, 256>}, {pipeline_mode = #tpu.pipeline_mode<synchronous>, transform_indices = @transform_2, window_bounds = array<i64: 1, 256>}, {pipeline_mode = #tpu.pipeline_mode<synchronous>, transform_indices = @transform_3, window_bounds = array<i64: 256, 64>}, {pipeline_mode = #tpu.pipeline_mode<synchronous>, transform_indices = @transform_4, window_bounds = array<i64: 1, 64>}, {pipeline_mode = #tpu.pipeline_mode<synchronous>, transform_indices = @transform_5, window_bounds = array<i64: 64, 128>}, {pipeline_mode = #tpu.pipeline_mode<synchronous>, transform_indices = @transform_6, window_bounds = array<i64: 1, 128>}, {transform_indices = @transform_7, window_bounds = array<i64: 16, 128>}]} {
    %c0 = arith.constant 0 : index
    %c0_0 = arith.constant 0 : index
    %0 = vector.load %arg1[%c0, %c0_0] : memref<16x784xf32, #tpu.memory_space<vmem>>, vector<16x784xf32>
    %1 = arith.truncf %0 : vector<16x784xf32> to vector<16x784xbf16>
    %c0_1 = arith.constant 0 : index
    %c0_2 = arith.constant 0 : index
    %2 = vector.load %arg2[%c0_1, %c0_2] : memref<784x256xbf16, #tpu.memory_space<vmem>>, vector<784x256xbf16>
    %cst = arith.constant dense<0.000000e+00> : vector<16x256xf32>
    %3 = tpu.matmul %1, %2, %cst {dimension_numbers = #tpu.dot_dimension_numbers<[1], [0], [0], [1], [0, 0, 1, 1], [], []>} : vector<16x784xbf16>, vector<784x256xbf16>, vector<16x256xf32> -> vector<16x256xf32>
    %c0_3 = arith.constant 0 : index
    %c0_4 = arith.constant 0 : index
    %4 = vector.load %arg3[%c0_3, %c0_4] : memref<1x256xf32, #tpu.memory_space<vmem>>, vector<1x256xf32>
    %5 = vector.broadcast %4 : vector<1x256xf32> to vector<16x256xf32>
    %6 = arith.addf %3, %5 : vector<16x256xf32>
    %cst_5 = arith.constant 0.000000e+00 : f32
    %7 = vector.broadcast %cst_5 : f32 to vector<16x256xf32>
    %8 = arith.maximumf %6, %7 : vector<16x256xf32>
    %9 = arith.truncf %8 : vector<16x256xf32> to vector<16x256xbf16>
    %c0_6 = arith.constant 0 : index
    %c0_7 = arith.constant 0 : index
    %10 = vector.load %arg4[%c0_6, %c0_7] : memref<256x64xbf16, #tpu.memory_space<vmem>>, vector<256x64xbf16>
    %cst_8 = arith.constant dense<0.000000e+00> : vector<16x64xf32>
    %11 = tpu.matmul %9, %10, %cst_8 {dimension_numbers = #tpu.dot_dimension_numbers<[1], [0], [0], [1], [0, 0, 1, 1], [], []>} : vector<16x256xbf16>, vector<256x64xbf16>, vector<16x64xf32> -> vector<16x64xf32>
    %c0_9 = arith.constant 0 : index
    %c0_10 = arith.constant 0 : index
    %12 = vector.load %arg5[%c0_9, %c0_10] : memref<1x64xf32, #tpu.memory_space<vmem>>, vector<1x64xf32>
    %13 = vector.broadcast %12 : vector<1x64xf32> to vector<16x64xf32>
    %14 = arith.addf %11, %13 : vector<16x64xf32>
    %cst_11 = arith.constant 0.000000e+00 : f32
    %15 = vector.broadcast %cst_11 : f32 to vector<16x64xf32>
    %16 = arith.maximumf %14, %15 : vector<16x64xf32>
    %17 = arith.truncf %16 : vector<16x64xf32> to vector<16x64xbf16>
    %c0_12 = arith.constant 0 : index
    %c0_13 = arith.constant 0 : index
    %18 = vector.load %arg6[%c0_12, %c0_13] : memref<64x128xbf16, #tpu.memory_space<vmem>>, vector<64x128xbf16>
    %cst_14 = arith.constant dense<0.000000e+00> : vector<16x128xf32>
    %19 = tpu.matmul %17, %18, %cst_14 {dimension_numbers = #tpu.dot_dimension_numbers<[1], [0], [0], [1], [0, 0, 1, 1], [], []>} : vector<16x64xbf16>, vector<64x128xbf16>, vector<16x128xf32> -> vector<16x128xf32>
    %c0_15 = arith.constant 0 : index
    %c0_16 = arith.constant 0 : index
    %20 = vector.load %arg7[%c0_15, %c0_16] : memref<1x128xf32, #tpu.memory_space<vmem>>, vector<1x128xf32>
    %21 = vector.broadcast %20 : vector<1x128xf32> to vector<16x128xf32>
    %22 = arith.addf %19, %21 : vector<16x128xf32>
    %cst_17 = arith.constant dense<0xFF800000> : vector<16xf32>
    %23 = vector.multi_reduction <maximumf>, %22, %cst_17 [1] : vector<16x128xf32> to vector<16xf32>
    %24 = vector.shape_cast %23 : vector<16xf32> to vector<16x1xf32>
    %25 = vector.broadcast %24 : vector<16x1xf32> to vector<16x128xf32>
    %26 = arith.subf %22, %25 : vector<16x128xf32>
    %27 = math.exp %26 : vector<16x128xf32>
    %cst_18 = arith.constant dense<0.000000e+00> : vector<16xf32>
    %28 = vector.multi_reduction <add>, %27, %cst_18 [1] : vector<16x128xf32> to vector<16xf32>
    %29 = vector.shape_cast %28 : vector<16xf32> to vector<16x1xf32>
    %30 = vector.broadcast %29 : vector<16x1xf32> to vector<16x128xf32>
    %31 = arith.divf %27, %30 : vector<16x128xf32>
    %32 = arith.truncf %31 : vector<16x128xf32> to vector<16x128xbf16>
    %c0_19 = arith.constant 0 : index
    %c0_20 = arith.constant 0 : index
    %33 = vector.load %arg8[%c0_19, %c0_20] : memref<16x128xbf16, #tpu.memory_space<vmem>>, vector<16x128xbf16>
    tpu.vector_store %arg8[%c0_19, %c0_20], %32 {strides = array<i32>} : memref<16x128xbf16, #tpu.memory_space<vmem>>, vector<16x128xbf16>,
    return
  }
  func.func @transform_0(%arg0: i32) -> (i32, i32) {
    %c0_i32 = arith.constant 0 : i32
    %c0_i32_0 = arith.constant 0 : i32
    return %arg0, %c0_i32 : i32, i32
  }
  func.func @transform_1(%arg0: i32) -> (i32, i32) {
    %c0_i32 = arith.constant 0 : i32
    %c0_i32_0 = arith.constant 0 : i32
    %c0_i32_1 = arith.constant 0 : i32
    return %c0_i32, %c0_i32_0 : i32, i32
  }
  func.func @transform_2(%arg0: i32) -> (i32, i32) {
    %c0_i32 = arith.constant 0 : i32
    %c0_i32_0 = arith.constant 0 : i32
    %c0_i32_1 = arith.constant 0 : i32
    return %c0_i32, %c0_i32_0 : i32, i32
  }
  func.func @transform_3(%arg0: i32) -> (i32, i32) {
    %c0_i32 = arith.constant 0 : i32
    %c0_i32_0 = arith.constant 0 : i32
    %c0_i32_1 = arith.constant 0 : i32
    return %c0_i32, %c0_i32_0 : i32, i32
  }
  func.func @transform_4(%arg0: i32) -> (i32, i32) {
    %c0_i32 = arith.constant 0 : i32
    %c0_i32_0 = arith.constant 0 : i32
    %c0_i32_1 = arith.constant 0 : i32
    return %c0_i32, %c0_i32_0 : i32, i32
  }
  func.func @transform_5(%arg0: i32) -> (i32, i32) {
    %c0_i32 = arith.constant 0 : i32
    %c0_i32_0 = arith.constant 0 : i32
    %c0_i32_1 = arith.constant 0 : i32
    return %c0_i32, %c0_i32_0 : i32, i32
  }
  func.func @transform_6(%arg0: i32) -> (i32, i32) {
    %c0_i32 = arith.constant 0 : i32
    %c0_i32_0 = arith.constant 0 : i32
    %c0_i32_1 = arith.constant 0 : i32
    return %c0_i32, %c0_i32_0 : i32, i32
  }
  func.func @transform_7(%arg0: i32) -> (i32, i32) {
    %c0_i32 = arith.constant 0 : i32
    %c0_i32_0 = arith.constant 0 : i32
    return %arg0, %c0_i32 : i32, i32
  }
}

</mosaic_0001>

<llo_original>
// kernel: tpu_custom_call.1
$region0: #{tpu_custom_call.1}
  #allocation0 [shape = 'u32[]', space=smem, size = 0x4, offset = 0x4, fixed_abs, tag = 'smem constant byte address 0x4 - core index']
  #allocation1 [shape = 'u32[72,128]{1,0:T(1,128)}', space=vmem, size = 0x9000, scoped, tag = 'internal scratch']
  %s0 = inlined_call_operand.vmem [shape: f32[16,784], index: 0, kind: input, shape index: {}]
  %s1 = inlined_call_operand.hbm [shape: bf16[784,256], index: 1, kind: input, shape index: {}]
  %s2 = inlined_call_operand.vmem [shape: f32[1,256], index: 2, kind: input, shape index: {}]
  %s3 = inlined_call_operand.vmem [shape: bf16[256,64], index: 3, kind: input, shape index: {}]
  %s4 = inlined_call_operand.vmem [shape: f32[1,64], index: 4, kind: input, shape index: {}]
  %s5 = inlined_call_operand.vmem [shape: bf16[64,128], index: 5, kind: input, shape index: {}]
  %s6 = inlined_call_operand.vmem [shape: f32[1,128], index: 6, kind: input, shape index: {}]
  %s7 = inlined_call_operand.hbm [shape: bf16[16,128], index: 7, kind: output, shape index: {}]
  %s8 = sld [smem:[#allocation0]]
  $region42: #{tpu_custom_call.1} parent=0
    _
  %s10 = ssub.s32 1, %s8
  %s11 = scalar_select 0, %s10, %s8
  $region1: #{tpu_custom_call.1} parent=0
    #allocation2 [shape = 'u8[401408]{0}', space=vmem, size = 0x62000, scoped, tag = 'input window, operand 1, single buffered']
    #allocation3 [shape = 's32[1]{0}', space=sflag, size = 0x4, scoped, tag = 'scoped memory for tpu_custom_call.1']
    #allocation4 [shape = 's32[1]{0}', space=sflag, size = 0x4, scoped, tag = 'scoped memory for tpu_custom_call.1']
    #allocation5 [shape = 'u8[4096]{0}', space=vmem, size = 0x1000, scoped, tag = 'output window, operand 0, single buffered']
    %12 = vsyncpa [#allocation3], 0
    %13 = vsyncpa [#allocation4], 0
    // Predicated region
    $region2: #{tpu_custom_call.1} parent=1 // pred_check
      _
    $region3: #{tpu_custom_call.1} parent=1 // pred_check_branch
      %15 = sbr.rel (0) target = $region5
    $region4: #{tpu_custom_call.1} parent=1 // pred_region
      _
    $region5: #{tpu_custom_call.1} parent=1 // pred_fallthru
      _
    // Predicated region
    $region6: #{tpu_custom_call.1} parent=1 // pred_check
      _
    $region7: #{tpu_custom_call.1} parent=1 // pred_check_branch
      %17 = sbr.rel (0) target = $region9
    $region8: #{tpu_custom_call.1} parent=1 // pred_region
      %19 = vsyncadd [#allocation3], 0
      %s20 = sshll.u32 %s1, 4
      %s21 = int_to_ptr.hbm [resolvable:$true] %s20
      %s22 = sshll.u32 [#allocation2], 4
      %s23 = int_to_ptr.vmem [resolvable:$true] %s22
      %28 = dma.hbm_to_vmem [thread:$0]  %s21, 12544, %s23, [#allocation3], 128, 128, 8
    $region9: #{tpu_custom_call.1} parent=1 // pred_fallthru
      _
    // Predicated region
    $region10: #{tpu_custom_call.1} parent=1 // pred_check
      _
    $region11: #{tpu_custom_call.1} parent=1 // pred_check_branch
      %30 = sbr.rel (0) target = $region13
    $region12: #{tpu_custom_call.1} parent=1 // pred_region
      _
    $region13: #{tpu_custom_call.1} parent=1 // pred_fallthru
      _
    // Predicated region
    $region14: #{tpu_custom_call.1} parent=1 // pred_check
      _
    $region15: #{tpu_custom_call.1} parent=1 // pred_check_branch
      %32 = sbr.rel (0) target = $region17
    $region16: #{tpu_custom_call.1} parent=1 // pred_region
      _
    $region17: #{tpu_custom_call.1} parent=1 // pred_fallthru
      _
    // Predicated region
    $region18: #{tpu_custom_call.1} parent=1 // pred_check
      _
    $region19: #{tpu_custom_call.1} parent=1 // pred_check_branch
      %34 = sbr.rel (0) target = $region21
    $region20: #{tpu_custom_call.1} parent=1 // pred_region
      _
    $region21: #{tpu_custom_call.1} parent=1 // pred_fallthru
      _
    // Predicated region
    $region22: #{tpu_custom_call.1} parent=1 // pred_check
      _
    $region23: #{tpu_custom_call.1} parent=1 // pred_check_branch
      %36 = sbr.rel (0) target = $region25
    $region24: #{tpu_custom_call.1} parent=1 // pred_region
      _
    $region25: #{tpu_custom_call.1} parent=1 // pred_fallthru
      _
    // Predicated region
    $region26: #{tpu_custom_call.1} parent=1 // pred_check
      _
    $region27: #{tpu_custom_call.1} parent=1 // pred_check_branch
      %38 = sbr.rel (0) target = $region29
    $region28: #{tpu_custom_call.1} parent=1 // pred_region
      _
    $region29: #{tpu_custom_call.1} parent=1 // pred_fallthru
      _
    // Predicated region
    $region30: #{tpu_custom_call.1} parent=1 // pred_check
      _
    $region31: #{tpu_custom_call.1} parent=1 // pred_check_branch
      %40 = sbr.rel (0) target = $region33
    $region32: #{tpu_custom_call.1} parent=1 // pred_region
      %42 = dma.done [#allocation3], 12544
    $region33: #{tpu_custom_call.1} parent=1 // pred_fallthru
      _
    %v44 = vld [vmem:[%s0] sm:$0xff]
    %v45 = vld [vmem:[%s0 + $0x8] sm:$0xff]
    %v46 = vld [vmem:[%s0 + $0x10] sm:$0xff]
    %v47 = vld [vmem:[%s0 + $0x18] sm:$0xff]
    %v48 = vld [vmem:[%s0 + $0x20] sm:$0xff]
    %v49 = vld [vmem:[%s0 + $0x28] sm:$0xff]
    %v50 = vld [vmem:[%s0 + $0x30] sm:$0xff]
    %v51 = vld [vmem:[%s0 + $0x38] sm:$0xff]
    %v52 = vld [vmem:[%s0 + $0x40] sm:$0xff]
    %v53 = vld [vmem:[%s0 + $0x48] sm:$0xff]
    %v54 = vld [vmem:[%s0 + $0x50] sm:$0xff]
    %v55 = vld [vmem:[%s0 + $0x58] sm:$0xff]
    %v56 = vld [vmem:[%s0 + $0x60] sm:$0xff]
    %v57 = vld [vmem:[%s0 + $0x68] sm:$0xff]
    %v58 = vpack.c.bf16 %v51, %v44
    %v59 = vpack.c.bf16 %v52, %v45
    %v60 = vpack.c.bf16 %v53, %v46
    %v61 = vpack.c.bf16 %v54, %v47
    %v62 = vpack.c.bf16 %v55, %v48
    %v63 = vpack.c.bf16 %v56, %v49
    %v64 = vpack.c.bf16 %v57, %v50
    %v65 = vld [vmem:[#allocation2] sm:$0xff]
    %v66 = vld [vmem:[#allocation2 + $0x8] sm:$0xff]
    %v67 = vld [vmem:[#allocation2 + $0x10] sm:$0xff]
    %v68 = vld [vmem:[#allocation2 + $0x18] sm:$0xff]
    %v69 = vld [vmem:[#allocation2 + $0x20] sm:$0xff]
    %v70 = vld [vmem:[#allocation2 + $0x28] sm:$0xff]
    %v71 = vld [vmem:[#allocation2 + $0x30] sm:$0xff]
    %v72 = vld [vmem:[#allocation2 + $0x38] sm:$0xff]
    %v73 = vld [vmem:[#allocation2 + $0x40] sm:$0xff]
    %v74 = vld [vmem:[#allocation2 + $0x48] sm:$0xff]
    %v75 = vld [vmem:[#allocation2 + $0x50] sm:$0xff]
    %v76 = vld [vmem:[#allocation2 + $0x58] sm:$0xff]
    %v77 = vld [vmem:[#allocation2 + $0x60] sm:$0xff]
    %v78 = vld [vmem:[#allocation2 + $0x68] sm:$0xff]
    %v79 = vld [vmem:[#allocation2 + $0x70] sm:$0xff]
    %v80 = vld [vmem:[#allocation2 + $0x78] sm:$0xff]
    %v81 = vld [vmem:[#allocation2 + $0x80] sm:$0xff]
    %v82 = vld [vmem:[#allocation2 + $0x88] sm:$0xff]
    %v83 = vld [vmem:[#allocation2 + $0x90] sm:$0xff]
    %v84 = vld [vmem:[#allocation2 + $0x98] sm:$0xff]
    %v85 = vld [vmem:[#allocation2 + $0xa0] sm:$0xff]
    %v86 = vld [vmem:[#allocation2 + $0xa8] sm:$0xff]
    %v87 = vld [vmem:[#allocation2 + $0xb0] sm:$0xff]
    %v88 = vld [vmem:[#allocation2 + $0xb8] sm:$0xff]
    %v89 = vld [vmem:[#allocation2 + $0xc0] sm:$0xff]
    %v90 = vld [vmem:[#allocation2 + $0xc8] sm:$0xff]
    %v91 = vld [vmem:[#allocation2 + $0xd0] sm:$0xff]
    %v92 = vld [vmem:[#allocation2 + $0xd8] sm:$0xff]
    %v93 = vld [vmem:[#allocation2 + $0xe0] sm:$0xff]
    %v94 = vld [vmem:[#allocation2 + $0xe8] sm:$0xff]
    %v95 = vld [vmem:[#allocation2 + $0xf0] sm:$0xff]
    %v96 = vld [vmem:[#allocation2 + $0xf8] sm:$0xff]
    %v97 = vld [vmem:[#allocation2 + $0x100] sm:$0xff]
    %v98 = vld [vmem:[#allocation2 + $0x108] sm:$0xff]
    %v99 = vld [vmem:[#allocation2 + $0x110] sm:$0xff]
    %v100 = vld [vmem:[#allocation2 + $0x118] sm:$0xff]
    %v101 = vld [vmem:[#allocation2 + $0x120] sm:$0xff]
    %v102 = vld [vmem:[#allocation2 + $0x128] sm:$0xff]
    %v103 = vld [vmem:[#allocation2 + $0x130] sm:$0xff]
    %v104 = vld [vmem:[#allocation2 + $0x138] sm:$0xff]
    %v105 = vld [vmem:[#allocation2 + $0x140] sm:$0xff]
    %v106 = vld [vmem:[#allocation2 + $0x148] sm:$0xff]
    %v107 = vld [vmem:[#allocation2 + $0x150] sm:$0xff]
    %v108 = vld [vmem:[#allocation2 + $0x158] sm:$0xff]
    %v109 = vld [vmem:[#allocation2 + $0x160] sm:$0xff]
    %v110 = vld [vmem:[#allocation2 + $0x168] sm:$0xff]
    %v111 = vld [vmem:[#allocation2 + $0x170] sm:$0xff]
    %v112 = vld [vmem:[#allocation2 + $0x178] sm:$0xff]
    %v113 = vld [vmem:[#allocation2 + $0x180] sm:$0xff]
    %v114 = vld [vmem:[#allocation2 + $0x188] sm:$0xff]
    %v115 = vld [vmem:[#allocation2 + $0x190] sm:$0xff]
    %v116 = vld [vmem:[#allocation2 + $0x198] sm:$0xff]
    %v117 = vld [vmem:[#allocation2 + $0x1a0] sm:$0xff]
    %v118 = vld [vmem:[#allocation2 + $0x1a8] sm:$0xff]
    %v119 = vld [vmem:[#allocation2 + $0x1b0] sm:$0xff]
    %v120 = vld [vmem:[#allocation2 + $0x1b8] sm:$0xff]
    %v121 = vld [vmem:[#allocation2 + $0x1c0] sm:$0xff]
    %v122 = vld [vmem:[#allocation2 + $0x1c8] sm:$0xff]
    %v123 = vld [vmem:[#allocation2 + $0x1d0] sm:$0xff]
    %v124 = vld [vmem:[#allocation2 + $0x1d8] sm:$0xff]
    %v125 = vld [vmem:[#allocation2 + $0x1e0] sm:$0xff]
    %v126 = vld [vmem:[#allocation2 + $0x1e8] sm:$0xff]
    %v127 = vld [vmem:[#allocation2 + $0x1f0] sm:$0xff]
    %v128 = vld [vmem:[#allocation2 + $0x1f8] sm:$0xff]
    %v129 = vld [vmem:[#allocation2 + $0x200] sm:$0xff]
    %v130 = vld [vmem:[#allocation2 + $0x208] sm:$0xff]
    %v131 = vld [vmem:[#allocation2 + $0x210] sm:$0xff]
    %v132 = vld [vmem:[#allocation2 + $0x218] sm:$0xff]
    %v133 = vld [vmem:[#allocation2 + $0x220] sm:$0xff]
    %v134 = vld [vmem:[#allocation2 + $0x228] sm:$0xff]
    %v135 = vld [vmem:[#allocation2 + $0x230] sm:$0xff]
    %v136 = vld [vmem:[#allocation2 + $0x238] sm:$0xff]
    %v137 = vld [vmem:[#allocation2 + $0x240] sm:$0xff]
    %v138 = vld [vmem:[#allocation2 + $0x248] sm:$0xff]
    %v139 = vld [vmem:[#allocation2 + $0x250] sm:$0xff]
    %v140 = vld [vmem:[#allocation2 + $0x258] sm:$0xff]
    %v141 = vld [vmem:[#allocation2 + $0x260] sm:$0xff]
    %v142 = vld [vmem:[#allocation2 + $0x268] sm:$0xff]
    %v143 = vld [vmem:[#allocation2 + $0x270] sm:$0xff]
    %v144 = vld [vmem:[#allocation2 + $0x278] sm:$0xff]
    %v145 = vld [vmem:[#allocation2 + $0x280] sm:$0xff]
    %v146 = vld [vmem:[#allocation2 + $0x288] sm:$0xff]
    %v147 = vld [vmem:[#allocation2 + $0x290] sm:$0xff]
    %v148 = vld [vmem:[#allocation2 + $0x298] sm:$0xff]
    %v149 = vld [vmem:[#allocation2 + $0x2a0] sm:$0xff]
    %v150 = vld [vmem:[#allocation2 + $0x2a8] sm:$0xff]
    %v151 = vld [vmem:[#allocation2 + $0x2b0] sm:$0xff]
    %v152 = vld [vmem:[#allocation2 + $0x2b8] sm:$0xff]
    %v153 = vld [vmem:[#allocation2 + $0x2c0] sm:$0xff]
    %v154 = vld [vmem:[#allocation2 + $0x2c8] sm:$0xff]
    %v155 = vld [vmem:[#allocation2 + $0x2d0] sm:$0xff]
    %v156 = vld [vmem:[#allocation2 + $0x2d8] sm:$0xff]
    %v157 = vld [vmem:[#allocation2 + $0x2e0] sm:$0xff]
    %v158 = vld [vmem:[#allocation2 + $0x2e8] sm:$0xff]
    %v159 = vld [vmem:[#allocation2 + $0x2f0] sm:$0xff]
    %v160 = vld [vmem:[#allocation2 + $0x2f8] sm:$0xff]
    %v161 = vld [vmem:[#allocation2 + $0x300] sm:$0xff]
    %v162 = vld [vmem:[#allocation2 + $0x308] sm:$0xff]
    %v163 = vld [vmem:[%s2] sm:$0x3]
    %v165 = vperm.slane %v163, 0
    %v166 = vperm.slane %v163, 1
    %v267 = vunpack.c.l.b16 %v65
    %v268 = vunpack.c.h.b16 %v65
    %v269 = vunpack.c.l.b16 %v66
    %v270 = vunpack.c.h.b16 %v66
    %v271 = vunpack.c.l.b16 %v67
    %v272 = vunpack.c.h.b16 %v67
    %v273 = vunpack.c.l.b16 %v68
    %v274 = vunpack.c.h.b16 %v68
    %v275 = vunpack.c.l.b16 %v69
    %v276 = vunpack.c.h.b16 %v69
    %v277 = vunpack.c.l.b16 %v70
    %v278 = vunpack.c.h.b16 %v70
    %v279 = vunpack.c.l.b16 %v71
    %v280 = vunpack.c.h.b16 %v71
    %v281 = vunpack.c.l.b16 %v72
    %v282 = vunpack.c.h.b16 %v72
    %v283 = vunpack.c.l.b16 %v73
    %v284 = vunpack.c.h.b16 %v73
    %v285 = vunpack.c.l.b16 %v74
    %v286 = vunpack.c.h.b16 %v74
    %v287 = vunpack.c.l.b16 %v75
    %v288 = vunpack.c.h.b16 %v75
    %v289 = vunpack.c.l.b16 %v76
    %v290 = vunpack.c.h.b16 %v76
    %v291 = vunpack.c.l.b16 %v77
    %v292 = vunpack.c.h.b16 %v77
    %v293 = vunpack.c.l.b16 %v78
    %v294 = vunpack.c.h.b16 %v78
    %v295 = vunpack.c.l.b16 %v79
    %v296 = vunpack.c.h.b16 %v79
    %v297 = vunpack.c.l.b16 %v80
    %v298 = vunpack.c.h.b16 %v80
    %v299 = vunpack.c.l.b16 %v81
    %v300 = vunpack.c.h.b16 %v81
    %v301 = vunpack.c.l.b16 %v82
    %v302 = vunpack.c.h.b16 %v82
    %v303 = vunpack.c.l.b16 %v83
    %v304 = vunpack.c.h.b16 %v83
    %v305 = vunpack.c.l.b16 %v84
    %v306 = vunpack.c.h.b16 %v84
    %v307 = vunpack.c.l.b16 %v85
    %v308 = vunpack.c.h.b16 %v85
    %v309 = vunpack.c.l.b16 %v86
    %v310 = vunpack.c.h.b16 %v86
    %v311 = vunpack.c.l.b16 %v87
    %v312 = vunpack.c.h.b16 %v87
    %v313 = vunpack.c.l.b16 %v88
    %v314 = vunpack.c.h.b16 %v88
    %v315 = vunpack.c.l.b16 %v89
    %v316 = vunpack.c.h.b16 %v89
    %v317 = vunpack.c.l.b16 %v90
    %v318 = vunpack.c.h.b16 %v90
    %v319 = vunpack.c.l.b16 %v91
    %v320 = vunpack.c.h.b16 %v91
    %v321 = vunpack.c.l.b16 %v92
    %v322 = vunpack.c.h.b16 %v92
    %v323 = vunpack.c.l.b16 %v93
    %v324 = vunpack.c.h.b16 %v93
    %v325 = vunpack.c.l.b16 %v94
    %v326 = vunpack.c.h.b16 %v94
    %v327 = vunpack.c.l.b16 %v95
    %v328 = vunpack.c.h.b16 %v95
    %v329 = vunpack.c.l.b16 %v96
    %v330 = vunpack.c.h.b16 %v96
    %v331 = vunpack.c.l.b16 %v97
    %v332 = vunpack.c.h.b16 %v97
    %v333 = vunpack.c.l.b16 %v98
    %v334 = vunpack.c.h.b16 %v98
    %v335 = vunpack.c.l.b16 %v99
    %v336 = vunpack.c.h.b16 %v99
    %v337 = vunpack.c.l.b16 %v100
    %v338 = vunpack.c.h.b16 %v100
    %v339 = vunpack.c.l.b16 %v101
    %v340 = vunpack.c.h.b16 %v101
    %v341 = vunpack.c.l.b16 %v102
    %v342 = vunpack.c.h.b16 %v102
    %v343 = vunpack.c.l.b16 %v103
    %v344 = vunpack.c.h.b16 %v103
    %v345 = vunpack.c.l.b16 %v104
    %v346 = vunpack.c.h.b16 %v104
    %v347 = vunpack.c.l.b16 %v105
    %v348 = vunpack.c.h.b16 %v105
    %v349 = vunpack.c.l.b16 %v106
    %v350 = vunpack.c.h.b16 %v106
    %v351 = vunpack.c.l.b16 %v107
    %v352 = vunpack.c.h.b16 %v107
    %v353 = vunpack.c.l.b16 %v108
    %v354 = vunpack.c.h.b16 %v108
    %v355 = vunpack.c.l.b16 %v109
    %v356 = vunpack.c.h.b16 %v109
    %v357 = vunpack.c.l.b16 %v110
    %v358 = vunpack.c.h.b16 %v110
    %v359 = vunpack.c.l.b16 %v111
    %v360 = vunpack.c.h.b16 %v111
    %v361 = vunpack.c.l.b16 %v112
    %v362 = vunpack.c.h.b16 %v112
    %v363 = vunpack.c.l.b16 %v113
    %v364 = vunpack.c.h.b16 %v113
    %v365 = vunpack.c.l.b16 %v114
    %v366 = vunpack.c.h.b16 %v114
    %v367 = vunpack.c.l.b16 %v115
    %v368 = vunpack.c.h.b16 %v115
    %v369 = vunpack.c.l.b16 %v116
    %v370 = vunpack.c.h.b16 %v116
    %v371 = vunpack.c.l.b16 %v117
    %v372 = vunpack.c.h.b16 %v117
    %v373 = vunpack.c.l.b16 %v118
    %v374 = vunpack.c.h.b16 %v118
    %v375 = vunpack.c.l.b16 %v119
    %v376 = vunpack.c.h.b16 %v119
    %v377 = vunpack.c.l.b16 %v120
    %v378 = vunpack.c.h.b16 %v120
    %v379 = vunpack.c.l.b16 %v121
    %v380 = vunpack.c.h.b16 %v121
    %v381 = vunpack.c.l.b16 %v122
    %v382 = vunpack.c.h.b16 %v122
    %v383 = vunpack.c.l.b16 %v123
    %v384 = vunpack.c.h.b16 %v123
    %v385 = vunpack.c.l.b16 %v124
    %v386 = vunpack.c.h.b16 %v124
    %v387 = vunpack.c.l.b16 %v125
    %v388 = vunpack.c.h.b16 %v125
    %v389 = vunpack.c.l.b16 %v126
    %v390 = vunpack.c.h.b16 %v126
    %v391 = vunpack.c.l.b16 %v127
    %v392 = vunpack.c.h.b16 %v127
    %v393 = vunpack.c.l.b16 %v128
    %v394 = vunpack.c.h.b16 %v128
    %v395 = vunpack.c.l.b16 %v129
    %v396 = vunpack.c.h.b16 %v129
    %v397 = vunpack.c.l.b16 %v130
    %v398 = vunpack.c.h.b16 %v130
    %v399 = vunpack.c.l.b16 %v131
    %v400 = vunpack.c.h.b16 %v131
    %v401 = vunpack.c.l.b16 %v132
    %v402 = vunpack.c.h.b16 %v132
    %v403 = vunpack.c.l.b16 %v133
    %v404 = vunpack.c.h.b16 %v133
    %v405 = vunpack.c.l.b16 %v134
    %v406 = vunpack.c.h.b16 %v134
    %v407 = vunpack.c.l.b16 %v135
    %v408 = vunpack.c.h.b16 %v135
    %v409 = vunpack.c.l.b16 %v136
    %v410 = vunpack.c.h.b16 %v136
    %v411 = vunpack.c.l.b16 %v137
    %v412 = vunpack.c.h.b16 %v137
    %v413 = vunpack.c.l.b16 %v138
    %v414 = vunpack.c.h.b16 %v138
    %v415 = vunpack.c.l.b16 %v139
    %v416 = vunpack.c.h.b16 %v139
    %v417 = vunpack.c.l.b16 %v140
    %v418 = vunpack.c.h.b16 %v140
    %v419 = vunpack.c.l.b16 %v141
    %v420 = vunpack.c.h.b16 %v141
    %v421 = vunpack.c.l.b16 %v142
    %v422 = vunpack.c.h.b16 %v142
    %v423 = vunpack.c.l.b16 %v143
    %v424 = vunpack.c.h.b16 %v143
    %v425 = vunpack.c.l.b16 %v144
    %v426 = vunpack.c.h.b16 %v144
    %v427 = vunpack.c.l.b16 %v145
    %v428 = vunpack.c.h.b16 %v145
    %v429 = vunpack.c.l.b16 %v146
    %v430 = vunpack.c.h.b16 %v146
    %v431 = vunpack.c.l.b16 %v147
    %v432 = vunpack.c.h.b16 %v147
    %v433 = vunpack.c.l.b16 %v148
    %v434 = vunpack.c.h.b16 %v148
    %v435 = vunpack.c.l.b16 %v149
    %v436 = vunpack.c.h.b16 %v149
    %v437 = vunpack.c.l.b16 %v150
    %v438 = vunpack.c.h.b16 %v150
    %v439 = vunpack.c.l.b16 %v151
    %v440 = vunpack.c.h.b16 %v151
    %v441 = vunpack.c.l.b16 %v152
    %v442 = vunpack.c.h.b16 %v152
    %v443 = vunpack.c.l.b16 %v153
    %v444 = vunpack.c.h.b16 %v153
    %v445 = vunpack.c.l.b16 %v154
    %v446 = vunpack.c.h.b16 %v154
    %v447 = vunpack.c.l.b16 %v155
    %v448 = vunpack.c.h.b16 %v155
    %v449 = vunpack.c.l.b16 %v156
    %v450 = vunpack.c.h.b16 %v156
    %v451 = vunpack.c.l.b16 %v157
    %v452 = vunpack.c.h.b16 %v157
    %v453 = vunpack.c.l.b16 %v158
    %v454 = vunpack.c.h.b16 %v158
    %v455 = vunpack.c.l.b16 %v159
    %v456 = vunpack.c.h.b16 %v159
    %v457 = vunpack.c.l.b16 %v160
    %v458 = vunpack.c.h.b16 %v160
    %v459 = vunpack.c.l.b16 %v161
    %v460 = vunpack.c.h.b16 %v161
    %v461 = vunpack.c.l.b16 %v162
    %v462 = vunpack.c.h.b16 %v162
    %v463 = vpack.c.b16 %v269, %v267
    %v464 = vpack.c.b16 %v270, %v268
    %v465 = vpack.c.b16 %v273, %v271
    %v466 = vpack.c.b16 %v274, %v272
    %v467 = vpack.c.b16 %v277, %v275
    %v468 = vpack.c.b16 %v278, %v276
    %v469 = vpack.c.b16 %v281, %v279
    %v470 = vpack.c.b16 %v282, %v280
    %v471 = vpack.c.b16 %v285, %v283
    %v472 = vpack.c.b16 %v286, %v284
    %v473 = vpack.c.b16 %v289, %v287
    %v474 = vpack.c.b16 %v290, %v288
    %v475 = vpack.c.b16 %v293, %v291
    %v476 = vpack.c.b16 %v294, %v292
    %v477 = vpack.c.b16 %v297, %v295
    %v478 = vpack.c.b16 %v298, %v296
    %v479 = vpack.c.b16 %v301, %v299
    %v480 = vpack.c.b16 %v302, %v300
    %v481 = vpack.c.b16 %v305, %v303
    %v482 = vpack.c.b16 %v306, %v304
    %v483 = vpack.c.b16 %v309, %v307
    %v484 = vpack.c.b16 %v310, %v308
    %v485 = vpack.c.b16 %v313, %v311
    %v486 = vpack.c.b16 %v314, %v312
    %v487 = vpack.c.b16 %v317, %v315
    %v488 = vpack.c.b16 %v318, %v316
    %v489 = vpack.c.b16 %v321, %v319
    %v490 = vpack.c.b16 %v322, %v320
    %v491 = vpack.c.b16 %v325, %v323
    %v492 = vpack.c.b16 %v326, %v324
    %v493 = vpack.c.b16 %v329, %v327
    %v494 = vpack.c.b16 %v330, %v328
    %v495 = vpack.c.b16 %v333, %v331
    %v496 = vpack.c.b16 %v334, %v332
    %v497 = vpack.c.b16 %v337, %v335
    %v498 = vpack.c.b16 %v338, %v336
    %v499 = vpack.c.b16 %v341, %v339
    %v500 = vpack.c.b16 %v342, %v340
    %v501 = vpack.c.b16 %v345, %v343
    %v502 = vpack.c.b16 %v346, %v344
    %v503 = vpack.c.b16 %v349, %v347
    %v504 = vpack.c.b16 %v350, %v348
    %v505 = vpack.c.b16 %v353, %v351
    %v506 = vpack.c.b16 %v354, %v352
    %v507 = vpack.c.b16 %v357, %v355
    %v508 = vpack.c.b16 %v358, %v356
    %v509 = vpack.c.b16 %v361, %v359
    %v510 = vpack.c.b16 %v362, %v360
    %v511 = vpack.c.b16 %v365, %v363
    %v512 = vpack.c.b16 %v366, %v364
    %v513 = vpack.c.b16 %v369, %v367
    %v514 = vpack.c.b16 %v370, %v368
    %v515 = vpack.c.b16 %v373, %v371
    %v516 = vpack.c.b16 %v374, %v372
    %v517 = vpack.c.b16 %v377, %v375
    %v518 = vpack.c.b16 %v378, %v376
    %v519 = vpack.c.b16 %v381, %v379
    %v520 = vpack.c.b16 %v382, %v380
    %v521 = vpack.c.b16 %v385, %v383
    %v522 = vpack.c.b16 %v386, %v384
    %v523 = vpack.c.b16 %v389, %v387
    %v524 = vpack.c.b16 %v390, %v388
    %v525 = vpack.c.b16 %v393, %v391
    %v526 = vpack.c.b16 %v394, %v392
    %v527 = vpack.c.b16 %v397, %v395
    %v528 = vpack.c.b16 %v398, %v396
    %v529 = vpack.c.b16 %v401, %v399
    %v530 = vpack.c.b16 %v402, %v400
    %v531 = vpack.c.b16 %v405, %v403
    %v532 = vpack.c.b16 %v406, %v404
    %v533 = vpack.c.b16 %v409, %v407
    %v534 = vpack.c.b16 %v410, %v408
    %v535 = vpack.c.b16 %v413, %v411
    %v536 = vpack.c.b16 %v414, %v412
    %v537 = vpack.c.b16 %v417, %v415
    %v538 = vpack.c.b16 %v418, %v416
    %v539 = vpack.c.b16 %v421, %v419
    %v540 = vpack.c.b16 %v422, %v420
    %v541 = vpack.c.b16 %v425, %v423
    %v542 = vpack.c.b16 %v426, %v424
    %v543 = vpack.c.b16 %v429, %v427
    %v544 = vpack.c.b16 %v430, %v428
    %v545 = vpack.c.b16 %v433, %v431
    %v546 = vpack.c.b16 %v434, %v432
    %v547 = vpack.c.b16 %v437, %v435
    %v548 = vpack.c.b16 %v438, %v436
    %v549 = vpack.c.b16 %v441, %v439
    %v550 = vpack.c.b16 %v442, %v440
    %v551 = vpack.c.b16 %v445, %v443
    %v552 = vpack.c.b16 %v446, %v444
    %v553 = vpack.c.b16 %v449, %v447
    %v554 = vpack.c.b16 %v450, %v448
    %v555 = vpack.c.b16 %v453, %v451
    %v556 = vpack.c.b16 %v454, %v452
    %v557 = vpack.c.b16 %v457, %v455
    %v558 = vpack.c.b16 %v458, %v456
    %v559 = vpack.c.b16 %v461, %v459
    %v560 = vpack.c.b16 %v462, %v460
    %vm659 = vcmask 130048
    %v661 = vsel %vm659, %v64, 0
    %663 = vmatpush.bf16.msra.mxu0 %v477
    %664 = vmatpush.bf16.msra.mxu0 %v475
    %665 = vmatpush.bf16.msra.mxu0 %v473
    %666 = vmatpush.bf16.msra.mxu0 %v471
    %667 = vmatpush.bf16.msra.mxu0 %v469
    %668 = vmatpush.bf16.msra.mxu0 %v467
    %669 = vmatpush.bf16.msra.mxu0 %v465
    %670 = vmatpush.bf16.msra.mxu0 %v463
    %671 = vmatmul.bf16.gmra.mxu0 %v58
    %v672 = vpop.f32.mrf.mxu0
    %v673 = vadd.f32 %v165, %v672
    %v674 = vpop.f32.mrf.mxu0
    %v675 = vadd.f32 %v165, %v674
    %676 = vdwg.mxu0
    %677 = vmatpush.bf16.msra.mxu0 %v493
    %678 = vmatpush.bf16.msra.mxu0 %v491
    %679 = vmatpush.bf16.msra.mxu0 %v489
    %680 = vmatpush.bf16.msra.mxu0 %v487
    %681 = vmatpush.bf16.msra.mxu0 %v485
    %682 = vmatpush.bf16.msra.mxu0 %v483
    %683 = vmatpush.bf16.msra.mxu0 %v481
    %684 = vmatpush.bf16.msra.mxu0 %v479
    %685 = vmatmul.bf16.gmra.mxu0 %v59
    %v686 = vpop.f32.mrf.mxu0
    %v687 = vadd.f32 %v673, %v686
    %v688 = vpop.f32.mrf.mxu0
    %v689 = vadd.f32 %v675, %v688
    %690 = vdwg.mxu0
    %691 = vmatpush.bf16.msra.mxu0 %v509
    %692 = vmatpush.bf16.msra.mxu0 %v507
    %693 = vmatpush.bf16.msra.mxu0 %v505
    %694 = vmatpush.bf16.msra.mxu0 %v503
    %695 = vmatpush.bf16.msra.mxu0 %v501
    %696 = vmatpush.bf16.msra.mxu0 %v499
    %697 = vmatpush.bf16.msra.mxu0 %v497
    %698 = vmatpush.bf16.msra.mxu0 %v495
    %699 = vmatmul.bf16.gmra.mxu0 %v60
    %v700 = vpop.f32.mrf.mxu0
    %v701 = vadd.f32 %v687, %v700
    %v702 = vpop.f32.mrf.mxu0
    %v703 = vadd.f32 %v689, %v702
    %704 = vdwg.mxu0
    %705 = vmatpush.bf16.msra.mxu0 %v525
    %706 = vmatpush.bf16.msra.mxu0 %v523
    %707 = vmatpush.bf16.msra.mxu0 %v521
    %708 = vmatpush.bf16.msra.mxu0 %v519
    %709 = vmatpush.bf16.msra.mxu0 %v517
    %710 = vmatpush.bf16.msra.mxu0 %v515
    %711 = vmatpush.bf16.msra.mxu0 %v513
    %712 = vmatpush.bf16.msra.mxu0 %v511
    %713 = vmatmul.bf16.gmra.mxu0 %v61
    %v714 = vpop.f32.mrf.mxu0
    %v715 = vadd.f32 %v701, %v714
    %v716 = vpop.f32.mrf.mxu0
    %v717 = vadd.f32 %v703, %v716
    %718 = vdwg.mxu0
    %719 = vmatpush.bf16.msra.mxu0 %v541
    %720 = vmatpush.bf16.msra.mxu0 %v539
    %721 = vmatpush.bf16.msra.mxu0 %v537
    %722 = vmatpush.bf16.msra.mxu0 %v535
    %723 = vmatpush.bf16.msra.mxu0 %v533
    %724 = vmatpush.bf16.msra.mxu0 %v531
    %725 = vmatpush.bf16.msra.mxu0 %v529
    %726 = vmatpush.bf16.msra.mxu0 %v527
    %727 = vmatmul.bf16.gmra.mxu0 %v62
    %v728 = vpop.f32.mrf.mxu0
    %v729 = vadd.f32 %v715, %v728
    %v730 = vpop.f32.mrf.mxu0
    %v731 = vadd.f32 %v717, %v730
    %732 = vdwg.mxu0
    %733 = vmatpush.bf16.msra.mxu0 %v557
    %734 = vmatpush.bf16.msra.mxu0 %v555
    %735 = vmatpush.bf16.msra.mxu0 %v553
    %736 = vmatpush.bf16.msra.mxu0 %v551
    %737 = vmatpush.bf16.msra.mxu0 %v549
    %738 = vmatpush.bf16.msra.mxu0 %v547
    %739 = vmatpush.bf16.msra.mxu0 %v545
    %740 = vmatpush.bf16.msra.mxu0 %v543
    %741 = vmatmul.bf16.gmra.mxu0 %v63
    %v742 = vpop.f32.mrf.mxu0
    %v743 = vadd.f32 %v729, %v742
    %v744 = vpop.f32.mrf.mxu0
    %v745 = vadd.f32 %v731, %v744
    %746 = vdwg.mxu0
    %747 = vmatpush.bf16.msra.mxu0 0
    %748 = vmatpush.bf16.msra.mxu0 0
    %749 = vmatpush.bf16.msra.mxu0 0
    %750 = vmatpush.bf16.msra.mxu0 0
    %751 = vmatpush.bf16.msra.mxu0 0
    %752 = vmatpush.bf16.msra.mxu0 0
    %753 = vmatpush.bf16.msra.mxu0 0
    %754 = vmatpush.bf16.msra.mxu0 %v559
    %755 = vmatmul.bf16.gmra.mxu0 %v661
    %v756 = vpop.f32.mrf.mxu0
    %v757 = vadd.f32 %v743, %v756
    %v758 = vpop.f32.mrf.mxu0
    %v759 = vadd.f32 %v745, %v758
    %760 = vdwg.mxu0
    %761 = vmatpush.bf16.msra.mxu0 %v478
    %762 = vmatpush.bf16.msra.mxu0 %v476
    %763 = vmatpush.bf16.msra.mxu0 %v474
    %764 = vmatpush.bf16.msra.mxu0 %v472
    %765 = vmatpush.bf16.msra.mxu0 %v470
    %766 = vmatpush.bf16.msra.mxu0 %v468
    %767 = vmatpush.bf16.msra.mxu0 %v466
    %768 = vmatpush.bf16.msra.mxu0 %v464
    %769 = vmatmul.bf16.gmra.mxu0 %v58
    %v770 = vpop.f32.mrf.mxu0
    %v771 = vadd.f32 %v166, %v770
    %v772 = vpop.f32.mrf.mxu0
    %v773 = vadd.f32 %v166, %v772
    %774 = vdwg.mxu0
    %775 = vmatpush.bf16.msra.mxu0 %v494
    %776 = vmatpush.bf16.msra.mxu0 %v492
    %777 = vmatpush.bf16.msra.mxu0 %v490
    %778 = vmatpush.bf16.msra.mxu0 %v488
    %779 = vmatpush.bf16.msra.mxu0 %v486
    %780 = vmatpush.bf16.msra.mxu0 %v484
    %781 = vmatpush.bf16.msra.mxu0 %v482
    %782 = vmatpush.bf16.msra.mxu0 %v480
    %783 = vmatmul.bf16.gmra.mxu0 %v59
    %v784 = vpop.f32.mrf.mxu0
    %v785 = vadd.f32 %v771, %v784
    %v786 = vpop.f32.mrf.mxu0
    %v787 = vadd.f32 %v773, %v786
    %788 = vdwg.mxu0
    %789 = vmatpush.bf16.msra.mxu0 %v510
    %790 = vmatpush.bf16.msra.mxu0 %v508
    %791 = vmatpush.bf16.msra.mxu0 %v506
    %792 = vmatpush.bf16.msra.mxu0 %v504
    %793 = vmatpush.bf16.msra.mxu0 %v502
    %794 = vmatpush.bf16.msra.mxu0 %v500
    %795 = vmatpush.bf16.msra.mxu0 %v498
    %796 = vmatpush.bf16.msra.mxu0 %v496
    %797 = vmatmul.bf16.gmra.mxu0 %v60
    %v798 = vpop.f32.mrf.mxu0
    %v799 = vadd.f32 %v785, %v798
    %v800 = vpop.f32.mrf.mxu0
    %v801 = vadd.f32 %v787, %v800
    %802 = vdwg.mxu0
    %803 = vmatpush.bf16.msra.mxu0 %v526
    %804 = vmatpush.bf16.msra.mxu0 %v524
    %805 = vmatpush.bf16.msra.mxu0 %v522
    %806 = vmatpush.bf16.msra.mxu0 %v520
    %807 = vmatpush.bf16.msra.mxu0 %v518
    %808 = vmatpush.bf16.msra.mxu0 %v516
    %809 = vmatpush.bf16.msra.mxu0 %v514
    %810 = vmatpush.bf16.msra.mxu0 %v512
    %811 = vmatmul.bf16.gmra.mxu0 %v61
    %v812 = vpop.f32.mrf.mxu0
    %v813 = vadd.f32 %v799, %v812
    %v814 = vpop.f32.mrf.mxu0
    %v815 = vadd.f32 %v801, %v814
    %816 = vdwg.mxu0
    %817 = vmatpush.bf16.msra.mxu0 %v542
    %818 = vmatpush.bf16.msra.mxu0 %v540
    %819 = vmatpush.bf16.msra.mxu0 %v538
    %820 = vmatpush.bf16.msra.mxu0 %v536
    %821 = vmatpush.bf16.msra.mxu0 %v534
    %822 = vmatpush.bf16.msra.mxu0 %v532
    %823 = vmatpush.bf16.msra.mxu0 %v530
    %824 = vmatpush.bf16.msra.mxu0 %v528
    %825 = vmatmul.bf16.gmra.mxu0 %v62
    %v826 = vpop.f32.mrf.mxu0
    %v827 = vadd.f32 %v813, %v826
    %v828 = vpop.f32.mrf.mxu0
    %v829 = vadd.f32 %v815, %v828
    %830 = vdwg.mxu0
    %831 = vmatpush.bf16.msra.mxu0 %v558
    %832 = vmatpush.bf16.msra.mxu0 %v556
    %833 = vmatpush.bf16.msra.mxu0 %v554
    %834 = vmatpush.bf16.msra.mxu0 %v552
    %835 = vmatpush.bf16.msra.mxu0 %v550
    %836 = vmatpush.bf16.msra.mxu0 %v548
    %837 = vmatpush.bf16.msra.mxu0 %v546
    %838 = vmatpush.bf16.msra.mxu0 %v544
    %839 = vmatmul.bf16.gmra.mxu0 %v63
    %v840 = vpop.f32.mrf.mxu0
    %v841 = vadd.f32 %v827, %v840
    %v842 = vpop.f32.mrf.mxu0
    %v843 = vadd.f32 %v829, %v842
    %844 = vdwg.mxu0
    %845 = vmatpush.bf16.msra.mxu0 0
    %846 = vmatpush.bf16.msra.mxu0 0
    %847 = vmatpush.bf16.msra.mxu0 0
    %848 = vmatpush.bf16.msra.mxu0 0
    %849 = vmatpush.bf16.msra.mxu0 0
    %850 = vmatpush.bf16.msra.mxu0 0
    %851 = vmatpush.bf16.msra.mxu0 0
    %852 = vmatpush.bf16.msra.mxu0 %v560
    %853 = vmatmul.bf16.gmra.mxu0 %v661
    %v854 = vpop.f32.mrf.mxu0
    %v855 = vadd.f32 %v841, %v854
    %v856 = vpop.f32.mrf.mxu0
    %v857 = vadd.f32 %v843, %v856
    %858 = vdwg.mxu0
    %v859 = vmax.f32 %v757, 0.0
    %v860 = vmax.f32 %v855, 0.0
    %v861 = vmax.f32 %v759, 0.0
    %v862 = vmax.f32 %v857, 0.0
    %v863 = vpack.c.bf16 %v861, %v859
    %v864 = vpack.c.bf16 %v862, %v860
    %v865 = vld [vmem:[%s3] sm:$0xf]
    %v866 = vld [vmem:[%s3 + $0x4] sm:$0xf]
    %v867 = vld [vmem:[%s3 + $0x8] sm:$0xf]
    %v868 = vld [vmem:[%s3 + $0xc] sm:$0xf]
    %v869 = vld [vmem:[%s3 + $0x10] sm:$0xf]
    %v870 = vld [vmem:[%s3 + $0x14] sm:$0xf]
    %v871 = vld [vmem:[%s3 + $0x18] sm:$0xf]
    %v872 = vld [vmem:[%s3 + $0x1c] sm:$0xf]
    %v873 = vld [vmem:[%s3 + $0x20] sm:$0xf]
    %v874 = vld [vmem:[%s3 + $0x24] sm:$0xf]
    %v875 = vld [vmem:[%s3 + $0x28] sm:$0xf]
    %v876 = vld [vmem:[%s3 + $0x2c] sm:$0xf]
    %v877 = vld [vmem:[%s3 + $0x30] sm:$0xf]
    %v878 = vld [vmem:[%s3 + $0x34] sm:$0xf]
    %v879 = vld [vmem:[%s3 + $0x38] sm:$0xf]
    %v880 = vld [vmem:[%s3 + $0x3c] sm:$0xf]
    %v881 = vld [vmem:[%s3 + $0x40] sm:$0xf]
    %v882 = vld [vmem:[%s3 + $0x44] sm:$0xf]
    %v883 = vld [vmem:[%s3 + $0x48] sm:$0xf]
    %v884 = vld [vmem:[%s3 + $0x4c] sm:$0xf]
    %v885 = vld [vmem:[%s3 + $0x50] sm:$0xf]
    %v886 = vld [vmem:[%s3 + $0x54] sm:$0xf]
    %v887 = vld [vmem:[%s3 + $0x58] sm:$0xf]
    %v888 = vld [vmem:[%s3 + $0x5c] sm:$0xf]
    %v889 = vld [vmem:[%s3 + $0x60] sm:$0xf]
    %v890 = vld [vmem:[%s3 + $0x64] sm:$0xf]
    %v891 = vld [vmem:[%s3 + $0x68] sm:$0xf]
    %v892 = vld [vmem:[%s3 + $0x6c] sm:$0xf]
    %v893 = vld [vmem:[%s3 + $0x70] sm:$0xf]
    %v894 = vld [vmem:[%s3 + $0x74] sm:$0xf]
    %v895 = vld [vmem:[%s3 + $0x78] sm:$0xf]
    %v896 = vld [vmem:[%s3 + $0x7c] sm:$0xf]
    %v897 = vld [vmem:[%s4] sm:$0x1]
    %v899 = vperm.slane %v897, 0
    %v933 = vunpack.c.l.b16 %v865
    %v934 = vunpack.c.l.b16 %v866
    %v935 = vunpack.c.l.b16 %v867
    %v936 = vunpack.c.l.b16 %v868
    %v937 = vunpack.c.l.b16 %v869
    %v938 = vunpack.c.l.b16 %v870
    %v939 = vunpack.c.l.b16 %v871
    %v940 = vunpack.c.l.b16 %v872
    %v941 = vunpack.c.l.b16 %v873
    %v942 = vunpack.c.l.b16 %v874
    %v943 = vunpack.c.l.b16 %v875
    %v944 = vunpack.c.l.b16 %v876
    %v945 = vunpack.c.l.b16 %v877
    %v946 = vunpack.c.l.b16 %v878
    %v947 = vunpack.c.l.b16 %v879
    %v948 = vunpack.c.l.b16 %v880
    %v949 = vunpack.c.l.b16 %v881
    %v950 = vunpack.c.l.b16 %v882
    %v951 = vunpack.c.l.b16 %v883
    %v952 = vunpack.c.l.b16 %v884
    %v953 = vunpack.c.l.b16 %v885
    %v954 = vunpack.c.l.b16 %v886
    %v955 = vunpack.c.l.b16 %v887
    %v956 = vunpack.c.l.b16 %v888
    %v957 = vunpack.c.l.b16 %v889
    %v958 = vunpack.c.l.b16 %v890
    %v959 = vunpack.c.l.b16 %v891
    %v960 = vunpack.c.l.b16 %v892
    %v961 = vunpack.c.l.b16 %v893
    %v962 = vunpack.c.l.b16 %v894
    %v963 = vunpack.c.l.b16 %v895
    %v964 = vunpack.c.l.b16 %v896
    %v965 = vpack.c.b16 %v934, %v933
    %v966 = vpack.c.b16 %v936, %v935
    %v967 = vpack.c.b16 %v938, %v937
    %v968 = vpack.c.b16 %v940, %v939
    %v969 = vpack.c.b16 %v942, %v941
    %v970 = vpack.c.b16 %v944, %v943
    %v971 = vpack.c.b16 %v946, %v945
    %v972 = vpack.c.b16 %v948, %v947
    %v973 = vpack.c.b16 %v950, %v949
    %v974 = vpack.c.b16 %v952, %v951
    %v975 = vpack.c.b16 %v954, %v953
    %v976 = vpack.c.b16 %v956, %v955
    %v977 = vpack.c.b16 %v958, %v957
    %v978 = vpack.c.b16 %v960, %v959
    %v979 = vpack.c.b16 %v962, %v961
    %v980 = vpack.c.b16 %v964, %v963
    %997 = vmatpush.bf16.msra.mxu0 %v972
    %998 = vmatpush.bf16.msra.mxu0 %v971
    %999 = vmatpush.bf16.msra.mxu0 %v970
    %1000 = vmatpush.bf16.msra.mxu0 %v969
    %1001 = vmatpush.bf16.msra.mxu0 %v968
    %1002 = vmatpush.bf16.msra.mxu0 %v967
    %1003 = vmatpush.bf16.msra.mxu0 %v966
    %1004 = vmatpush.bf16.msra.mxu0 %v965
    %1005 = vmatmul.bf16.gmra.mxu0 %v863
    %v1006 = vpop.f32.mrf.mxu0
    %v1007 = vadd.f32 %v899, %v1006
    %v1008 = vpop.f32.mrf.mxu0
    %v1009 = vadd.f32 %v899, %v1008
    %1010 = vdwg.mxu0
    %1011 = vmatpush.bf16.msra.mxu0 %v980
    %1012 = vmatpush.bf16.msra.mxu0 %v979
    %1013 = vmatpush.bf16.msra.mxu0 %v978
    %1014 = vmatpush.bf16.msra.mxu0 %v977
    %1015 = vmatpush.bf16.msra.mxu0 %v976
    %1016 = vmatpush.bf16.msra.mxu0 %v975
    %1017 = vmatpush.bf16.msra.mxu0 %v974
    %1018 = vmatpush.bf16.msra.mxu0 %v973
    %1019 = vmatmul.bf16.gmra.mxu0 %v864
    %v1020 = vpop.f32.mrf.mxu0
    %v1021 = vadd.f32 %v1007, %v1020
    %v1022 = vpop.f32.mrf.mxu0
    %v1023 = vadd.f32 %v1009, %v1022
    %1024 = vdwg.mxu0
    %v1025 = vmax.f32 %v1021, 0.0
    %v1026 = vmax.f32 %v1023, 0.0
    %v1027 = vpack.c.bf16 %v1026, %v1025
    %v1028 = vld [vmem:[%s5] sm:$0xf]
    %v1029 = vld [vmem:[%s5 + $0x4] sm:$0xf]
    %v1030 = vld [vmem:[%s5 + $0x8] sm:$0xf]
    %v1031 = vld [vmem:[%s5 + $0xc] sm:$0xf]
    %v1032 = vld [vmem:[%s5 + $0x10] sm:$0xf]
    %v1033 = vld [vmem:[%s5 + $0x14] sm:$0xf]
    %v1034 = vld [vmem:[%s5 + $0x18] sm:$0xf]
    %v1035 = vld [vmem:[%s5 + $0x1c] sm:$0xf]
    %v1036 = vld [vmem:[%s6] sm:$0x1]
    %v1038 = vperm.slane %v1036, 0
    %v1048 = vunpack.c.l.b16 %v1028
    %v1049 = vunpack.c.l.b16 %v1029
    %v1050 = vunpack.c.l.b16 %v1030
    %v1051 = vunpack.c.l.b16 %v1031
    %v1052 = vunpack.c.l.b16 %v1032
    %v1053 = vunpack.c.l.b16 %v1033
    %v1054 = vunpack.c.l.b16 %v1034
    %v1055 = vunpack.c.l.b16 %v1035
    %v1056 = vpack.c.b16 %v1049, %v1048
    %v1057 = vpack.c.b16 %v1051, %v1050
    %v1058 = vpack.c.b16 %v1053, %v1052
    %v1059 = vpack.c.b16 %v1055, %v1054
    %vm1064 = vcmask 523264
    %v1066 = vsel %vm1064, %v1027, 0
    %1068 = vmatpush.bf16.msra.mxu0 0
    %1069 = vmatpush.bf16.msra.mxu0 0
    %1070 = vmatpush.bf16.msra.mxu0 0
    %1071 = vmatpush.bf16.msra.mxu0 0
    %1072 = vmatpush.bf16.msra.mxu0 %v1059
    %1073 = vmatpush.bf16.msra.mxu0 %v1058
    %1074 = vmatpush.bf16.msra.mxu0 %v1057
    %1075 = vmatpush.bf16.msra.mxu0 %v1056
    %1076 = vmatmul.bf16.gmra.mxu0 %v1066
    %v1077 = vpop.f32.mrf.mxu0
    %v1078 = vadd.f32 %v1038, %v1077
    %v1079 = vpop.f32.mrf.mxu0
    %v1080 = vadd.f32 %v1038, %v1079
    %1081 = vdwg.mxu0
    %1082 = vmax.xlane.f32.xlu0 %v1078
    %v1083 = vpop.xlane.xlu0 %1082
    %1084 = vmax.xlane.f32.xlu0 %v1080
    %v1085 = vpop.xlane.xlu0 %1084
    %v1086 = vsub.f32 %v1078, %v1083
    %v1087 = vsub.f32 %v1080, %v1085
    %v1088 = vmul.f32 %v1086, 1.442695
    %v1089 = vpow.pop %v1088
    %v1090 = vmul.f32 %v1087, 1.442695
    %v1091 = vpow.pop %v1090
    %1092 = vadd.xlane.f32.xlu0 %v1089
    %v1093 = vpop.xlane.xlu0 %1092
    %1094 = vadd.xlane.f32.xlu0 %v1091
    %v1095 = vpop.xlane.xlu0 %1094
    %v1096 = vrcp.pop %v1093
    %v1097 = vmul.f32 %v1093, %v1096
    %v1098 = vsub.f32 1.0, %v1097
    %v1099 = vmul.f32 %v1096, %v1098
    %v1100 = vadd.f32 %v1096, %v1099
    %vm1101 = vweird.f32 %v1093
    %vm1102 = vweird.f32 %v1096
    %vm1103 = vmor %vm1101, %vm1102
    %v1104 = vsel %vm1103, %v1096, %v1100
    %v1105 = vand.u32 2147483647, %v1093
    %vm1106 = vcmp.eq.f32.partialorder %v1105, 8.507059e+37
    %v1107 = vand.u32 %v1093, 2147483648
    %v1108 = vor.u32 1.1754944e-38, %v1107
    %v1109 = vsel %vm1106, %v1108, %v1104
    %v1110 = vmul.f32 %v1089, %v1109
    %v1111 = vrcp.pop %v1095
    %v1112 = vmul.f32 %v1095, %v1111
    %v1113 = vsub.f32 1.0, %v1112
    %v1114 = vmul.f32 %v1111, %v1113
    %v1115 = vadd.f32 %v1111, %v1114
    %vm1116 = vweird.f32 %v1095
    %vm1117 = vweird.f32 %v1111
    %vm1118 = vmor %vm1116, %vm1117
    %v1119 = vsel %vm1118, %v1111, %v1115
    %v1120 = vand.u32 2147483647, %v1095
    %vm1121 = vcmp.eq.f32.partialorder %v1120, 8.507059e+37
    %v1122 = vand.u32 %v1095, 2147483648
    %v1123 = vor.u32 1.1754944e-38, %v1122
    %v1124 = vsel %vm1121, %v1123, %v1119
    %v1125 = vmul.f32 %v1091, %v1124
    %v1126 = vpack.c.bf16 %v1110, %v1110
    %v1127 = vpack.c.bf16 %v1125, %v1125
    %1128 = vst [vmem:[#allocation5] sm:$0xf] %v1126
    %1129 = vst [vmem:[#allocation5 + $0x4] sm:$0xf] %v1127
    // Predicated region
    $region34: #{tpu_custom_call.1} parent=1 // pred_check
      _
    $region35: #{tpu_custom_call.1} parent=1 // pred_check_branch
      %1131 = sbr.rel (0) target = $region37
    $region36: #{tpu_custom_call.1} parent=1 // pred_region
      %1133 = vsyncadd [#allocation4], 0
      %s1134 = sshll.u32 [#allocation5], 4
      %s1135 = int_to_ptr.vmem [resolvable:$true] %s1134
      %s1136 = sshll.u32 %s7, 4
      %s1137 = int_to_ptr.hbm [resolvable:$true] %s1136
      %1142 = dma.vmem_to_hbm [thread:$0]  %s1135, 128, %s1137, [#allocation4], 64, 64, 4
    $region37: #{tpu_custom_call.1} parent=1 // pred_fallthru
      _
    // Predicated region
    $region38: #{tpu_custom_call.1} parent=1 // pred_check
      _
    $region39: #{tpu_custom_call.1} parent=1 // pred_check_branch
      %1144 = sbr.rel (0) target = $region41
    $region40: #{tpu_custom_call.1} parent=1 // pred_region
      %1146 = dma.done [#allocation4], 128
    $region41: #{tpu_custom_call.1} parent=1 // pred_fallthru
      _
    %1147 = vsyncpa [#allocation3], 1
    %1148 = vsyncpa [#allocation4], 1

</llo_original>
